<compile_context>
chip_gen: v7x
topology: tpu7x:2x2x1
jax: 0.10.0
libtpu: 0.0.40
codegen_flags: <defaults>
</compile_context>

<pallas_src>
import math

import jax
import jax.numpy as jnp
import numpy as np
from jax.experimental import pallas as pl
from jax.experimental.pallas import tpu as pltpu


# ----------------------------------------------------------------------------
# Per-generation tile / VMEM budgets
# ----------------------------------------------------------------------------
_SMALL_INPUT_BYTES = 1 << 20   # below this, plain jnp beats Pallas dispatch overhead
_LANE = 128


def _chip_budgets():
    """Return (tile_bytes_target, vmem_limit_bytes); conservative (v7x-safe) default."""
    tile_bytes = 2 * 1024 * 1024          # v7x: 64 MiB physical VMEM -> keep 2 MiB tiles
    vmem_limit = 48 * 1024 * 1024         # leave headroom on v7x
    try:
        kind = jax.devices()[0].device_kind.lower()
    except Exception:
        kind = ""
    if ("v5" in kind) or ("v6" in kind):  # 128 MiB-VMEM generations
        tile_bytes = 4 * 1024 * 1024      # 3 refs x 2 bufs x 4 MiB = 24 MiB << 64 MiB
        vmem_limit = 64 * 1024 * 1024
    return tile_bytes, vmem_limit


def _sublane_align(dtype):
    # Sub-32-bit dtypes pack along sublanes -> need more rows to fill a vreg.
    return max(8, 32 // np.dtype(dtype).itemsize)


def _flat_2d_layout(n):
    """Pick a lane-dense (rows, cols) factorization of n, cols a multiple of 128.

    Returns (None, None) when no clean factorization exists (caller falls back
    to plain jnp instead of risking a huge full-extent tile)."""
    for cols in (8 * _LANE, 4 * _LANE, 2 * _LANE, _LANE):
        if n % cols == 0:
            return n // cols, cols
    return None, None


def _pick_row_tile(rows, cols, dtype, tile_bytes_target):
    """Row-tile: sublane aligned, ~tile_bytes_target, >=2 grid steps when possible."""
    align = _sublane_align(dtype)
    if rows <= align:
        return rows                                              # full-extent block (legal)
    itemsize = np.dtype(dtype).itemsize
    max_rows = max(align, (tile_bytes_target // (cols * itemsize)) // align * align)
    tr = min(max_rows, pl.cdiv(rows, align) * align)
    if tr >= rows and rows >= 2 * align:
        # Split so the (parallel) grid has >= 2 steps — v7x has 2 TensorCores.
        tr = pl.cdiv(pl.cdiv(rows, 2), align) * align
    return tr


# ----------------------------------------------------------------------------
# Kernels: lane-dense 2-D streaming copy and elementwise add (VPU only).
# ----------------------------------------------------------------------------
def _copy_kernel(x_ref, o_ref):
    o_ref[...] = x_ref[...]


def _add_kernel(a_ref, b_ref, o_ref):
    o_ref[...] = a_ref[...] + b_ref[...]


def _elementwise_2d(kernel, arrays, out_dtype, flops_per_elem):
    """Run `kernel` over identically-shaped (rows, cols) arrays with row tiling."""
    rows, cols = arrays[0].shape
    tile_bytes, vmem_limit = _chip_budgets()
    tr = _pick_row_tile(rows, cols, out_dtype, tile_bytes)
    grid = (pl.cdiv(rows, tr),)

    itemsize = np.dtype(out_dtype).itemsize
    n_bytes = rows * cols * itemsize
    cost = pl.CostEstimate(
        flops=rows * cols * flops_per_elem,
        transcendentals=0,
        bytes_accessed=(len(arrays) + 1) * n_bytes,
    )
    spec = pl.BlockSpec((tr, cols), lambda i: (i, 0))

    return pl.pallas_call(
        kernel,
        out_shape=jax.ShapeDtypeStruct((rows, cols), out_dtype),
        grid_spec=pltpu.PrefetchScalarGridSpec(
            num_scalar_prefetch=0,
            grid=grid,
            in_specs=[spec] * len(arrays),
            out_specs=spec,
        ),
        compiler_params=pltpu.CompilerParams(
            dimension_semantics=("parallel",),
            vmem_limit_bytes=vmem_limit),
        cost_estimate=cost,
    )(*arrays)


# ----------------------------------------------------------------------------
# Module ops
# ----------------------------------------------------------------------------
def flatten_forward(x, *, force_pallas=False):
    """CNN_GRU_V1.forward body: x.reshape(B, 1, -1).

    Default: metadata-only jnp.reshape (recommended — zero HBM traffic).
    force_pallas=True routes the data through the lane-dense Pallas copy kernel
    on a flat view (batch dim never used as the sublane axis)."""
    B = x.shape[0]
    F = math.prod(x.shape[1:])
    n = B * F
    if (not force_pallas) or n * x.dtype.itemsize < _SMALL_INPUT_BYTES and not force_pallas:
        return jnp.reshape(x, (B, 1, F))
    rows, cols = _flat_2d_layout(n)
    if rows is None:
        # TODO(synk): no 128-multiple factor of n — metadata-only reshape fallback.
        return jnp.reshape(x, (B, 1, F))
    x2 = jnp.reshape(x, (rows, cols))                       # metadata-only on contiguous NCHW
    out2 = _elementwise_2d(_copy_kernel, [x2], x.dtype, flops_per_elem=0)
    return jnp.reshape(out2, (B, 1, F))                     # metadata-only


def cross_attention_add(a, b, *, force_pallas=False):
    """CrossAttention's `output_a + output_b`, operands taken as the module inputs."""
    assert a.shape == b.shape and a.dtype == b.dtype, (a.shape, b.shape, a.dtype, b.dtype)
    n = math.prod(a.shape)
    small = n * a.dtype.itemsize < _SMALL_INPUT_BYTES
    if small and not force_pallas:
        return a + b                                        # dispatch overhead dominates
    rows, cols = _flat_2d_layout(n)
    if rows is None:
        return a + b                                        # graceful awkward-size fallback
    a2 = jnp.reshape(a, (rows, cols))
    b2 = jnp.reshape(b, (rows, cols))
    out2 = _elementwise_2d(_add_kernel, [a2, b2], a.dtype, flops_per_elem=1)
    return jnp.reshape(out2, a.shape)


# ----------------------------------------------------------------------------
# Module wrapper
# ----------------------------------------------------------------------------
class CNNGRUV1Pallas:
    """Pallas port of CNN_GRU_V1. The source module defines no parameters."""

    def __init__(self, in_channels=1, out_channels=64, batch_size=64,
                 feature=12, out_class=2, use_pallas_copy=False):
        self.hint_channel = 64
        self.use_pallas_copy = use_pallas_copy
        # CrossAttention.__init__ defines no layers -> nothing to initialize.
        self.cross_atten = cross_attention_add

    def __call__(self, x, force_pallas=False):
        # x: (B, C, H, W), NCHW like PyTorch.
        if self.use_pallas_copy:
            x1 = flatten_forward(x, force_pallas=force_pallas)
        else:
            x1 = jnp.reshape(x, (x.shape[0], 1, -1))        # metadata-only, recommended
        # TODO(synk): source forward returns undefined `out`; return x1 (the only
        # defined tensor) instead.
        return x1


if __name__ == "__main__":
    key = jax.random.PRNGKey(0)
    # Small NCHW conv-style input consistent with the module.
    B, C, H, W = 2, 4, 16, 16
    x = jax.random.normal(key, (B, C, H, W), dtype=jnp.float32)
    ref = jnp.reshape(x, (B, 1, -1))

    # Default (recommended) path: metadata-only reshape.
    model = CNNGRUV1Pallas(in_channels=C)
    out = jax.block_until_ready(model(x))
    assert out.shape == (B, 1, C * H * W), out.shape
    assert jnp.allclose(out, ref), "reshape path mismatch"

    # Pallas path (flat lane-dense copy kernel), forced past the small-input bypass.
    model_p = CNNGRUV1Pallas(in_channels=C, use_pallas_copy=True)
    out_p = jax.block_until_ready(model_p(x, force_pallas=True))
    assert out_p.shape == (B, 1, C * H * W), out_p.shape
    assert jnp.allclose(out_p, ref), "pallas copy path mismatch"

    # CrossAttention add kernel (operands = module inputs; see TODO above).
    ka, kb = jax.random.split(jax.random.PRNGKey(1))
    Feat = 64 * 12
    a = jax.random.normal(ka, (B, Feat), dtype=jnp.float32)
    b = jax.random.normal(kb, (B, Feat), dtype=jnp.float32)
    s_pallas = jax.block_until_ready(cross_attention_add(a, b, force_pallas=True))
    assert jnp.allclose(s_pallas, a + b), "pallas add mismatch"
    s_bypass = jax.block_until_ready(cross_attention_add(a, b))   # small-input jnp bypass
    assert jnp.allclose(s_bypass, a + b), "bypass add mismatch"

    print("KERNEL_OK")
</pallas_src>

<mosaic_0001>
module attributes {stable_mosaic.version = 11 : i64} {
  func.func @_copy_kernel(%arg0: i32, %arg1: memref<2x1024xf32, #tpu.memory_space<vmem>>, %arg2: memref<2x1024xf32, #tpu.memory_space<vmem>>) attributes {dimension_semantics = [#tpu.dimension_semantics<parallel>], iteration_bounds = array<i64: 1>, scalar_prefetch = 0 : i64, scratch_operands = 0 : i64, tpu.core_type = #tpu.core_type<tc>, window_params = [{transform_indices = @transform_0, window_bounds = array<i64: 2, 1024>}, {transform_indices = @transform_1, window_bounds = array<i64: 2, 1024>}]} {
    %c0 = arith.constant 0 : index
    %c0_0 = arith.constant 0 : index
    %0 = vector.load %arg1[%c0, %c0_0] : memref<2x1024xf32, #tpu.memory_space<vmem>>, vector<2x1024xf32>
    %c0_1 = arith.constant 0 : index
    %c0_2 = arith.constant 0 : index
    %1 = vector.load %arg2[%c0_1, %c0_2] : memref<2x1024xf32, #tpu.memory_space<vmem>>, vector<2x1024xf32>
    tpu.vector_store %arg2[%c0_1, %c0_2], %0 {strides = array<i32>} : memref<2x1024xf32, #tpu.memory_space<vmem>>, vector<2x1024xf32>,
    return
  }
  func.func @transform_0(%arg0: i32) -> (i32, i32) {
    %c0_i32 = arith.constant 0 : i32
    %c0_i32_0 = arith.constant 0 : i32
    return %arg0, %c0_i32 : i32, i32
  }
  func.func @transform_1(%arg0: i32) -> (i32, i32) {
    %c0_i32 = arith.constant 0 : i32
    %c0_i32_0 = arith.constant 0 : i32
    return %arg0, %c0_i32 : i32, i32
  }
}

</mosaic_0001>

<llo_original>
// kernel: tpu_custom_call.1
$region0: #{tpu_custom_call.1}
  #allocation0 [shape = 'u32[]', space=smem, size = 0x4, offset = 0x4, fixed_abs, tag = 'smem constant byte address 0x4 - core index']
  #allocation1 [shape = 'u32[144,128]{1,0:T(1,128)}', space=vmem, size = 0x12000, scoped, tag = 'internal scratch']
  %s0 = inlined_call_operand.hbm [shape: f32[2,1024], index: 0, kind: input, shape index: {}]
  %s1 = inlined_call_operand.hbm [shape: f32[2,1024], index: 1, kind: output, shape index: {}]
  %s2 = sld [smem:[#allocation0]]
  $region18: #{tpu_custom_call.1} parent=0
    _
  %s4 = ssub.s32 1, %s2
  %s5 = scalar_select 0, %s4, %s2
  $region1: #{tpu_custom_call.1} parent=0
    #allocation2 [shape = 'u8[8192]{0}', space=vmem, size = 0x2000, scoped, tag = 'input window, operand 0, single buffered']
    #allocation3 [shape = 's32[1]{0}', space=sflag, size = 0x4, scoped, tag = 'scoped memory for tpu_custom_call.1']
    #allocation4 [shape = 's32[1]{0}', space=sflag, size = 0x4, scoped, tag = 'scoped memory for tpu_custom_call.1']
    #allocation5 [shape = 'u8[8192]{0}', space=vmem, size = 0x2000, scoped, tag = 'output window, operand 0, single buffered']
    %6 = vsyncpa [#allocation3], 0
    %7 = vsyncpa [#allocation4], 0
    // Predicated region
    $region2: #{tpu_custom_call.1} parent=1 // pred_check
      _
    $region3: #{tpu_custom_call.1} parent=1 // pred_check_branch
      %9 = sbr.rel (0) target = $region5
    $region4: #{tpu_custom_call.1} parent=1 // pred_region
      %s11 = ssub.s32 256, 256
      %12 = vsyncadd [#allocation3], %s11
      %s14 = sshll.u32 [#allocation2], 4
      %s15 = int_to_ptr.vmem [resolvable:$true] %s14
      %17 = dma.hbm_to_vmem [thread:$0]  %s0, 256, %s15, [#allocation3]
    $region5: #{tpu_custom_call.1} parent=1 // pred_fallthru
      _
    // Predicated region
    $region6: #{tpu_custom_call.1} parent=1 // pred_check
      _
    $region7: #{tpu_custom_call.1} parent=1 // pred_check_branch
      %19 = sbr.rel (0) target = $region9
    $region8: #{tpu_custom_call.1} parent=1 // pred_region
      %20 = dma.done [#allocation3], 256
    $region9: #{tpu_custom_call.1} parent=1 // pred_fallthru
      _
    %v21 = vld [vmem:[#allocation2] sm:$0xff]
    %v22 = vld [vmem:[#allocation2 + $0x8] sm:$0xff]
    %23 = vst [vmem:[#allocation5] sm:$0xff] %v21
    %24 = vst [vmem:[#allocation5 + $0x8] sm:$0xff] %v22
    // Predicated region
    $region10: #{tpu_custom_call.1} parent=1 // pred_check
      _
    $region11: #{tpu_custom_call.1} parent=1 // pred_check_branch
      %26 = sbr.rel (0) target = $region13
    $region12: #{tpu_custom_call.1} parent=1 // pred_region
      %s28 = ssub.s32 256, 256
      %29 = vsyncadd [#allocation4], %s28
      %s31 = sshll.u32 [#allocation5], 4
      %s32 = int_to_ptr.vmem [resolvable:$true] %s31
      %34 = dma.vmem_to_hbm [thread:$0]  %s32, 256, %s1, [#allocation4]
    $region13: #{tpu_custom_call.1} parent=1 // pred_fallthru
      _
    // Predicated region
    $region14: #{tpu_custom_call.1} parent=1 // pred_check
      _
    $region15: #{tpu_custom_call.1} parent=1 // pred_check_branch
      %36 = sbr.rel (0) target = $region17
    $region16: #{tpu_custom_call.1} parent=1 // pred_region
      %37 = dma.done [#allocation4], 256
    $region17: #{tpu_custom_call.1} parent=1 // pred_fallthru
      _
    %38 = vsyncpa [#allocation3], 1
    %39 = vsyncpa [#allocation4], 1

</llo_original>
